<compile_context>
chip_gen: v5e
topology: v5e:2x2
jax: 0.10.0
libtpu: 0.0.40
codegen_flags: <defaults>
</compile_context>

<pallas_src>
import functools
import math

import jax
import jax.numpy as jnp
from jax.experimental import pallas as pl
from jax.experimental.pallas import tpu as pltpu


# ----------------------------------------------------------------------------
# pltpu.roll convention probe (tiny one-off kernel)
# ----------------------------------------------------------------------------
def _detect_roll_convention():
    """True if pltpu.roll matches np.roll semantics (out[i] = x[i - shift])."""
    def probe(x_ref, o_ref):
        o_ref[...] = pltpu.roll(x_ref[...], 1, axis=1)

    x = jnp.arange(8 * 128, dtype=jnp.float32).reshape(8, 128)
    y = pl.pallas_call(probe, out_shape=jax.ShapeDtypeStruct((8, 128), jnp.float32))(x)
    y = jax.device_get(y)
    return bool(y[0, 1] == 0.0)


# ----------------------------------------------------------------------------
# Fused kernel builder
# ----------------------------------------------------------------------------
def _build_kernel(*, block_num, H, W, c1, c2, mid_half, skip,
                  mxu_dtype, roll_is_np, lrelu_slope):
    n_pix = H * W
    n_in = 2 + 6 + 6 * block_num + 2     # tensors + 3 conv pairs + blocks + tail pair
    f32 = jnp.float32

    def kernel(*refs):
        out_ref = refs[n_in]
        it = iter(refs[:n_in])
        t1_ref, t2_ref = next(it), next(it)
        f1w_ref, f1b_ref = next(it), next(it)
        f1pw_ref, f1pb_ref = next(it), next(it)
        f2w_ref, f2b_ref = next(it), next(it)
        block_refs = [tuple(next(it) for _ in range(6)) for _ in range(block_num)]
        tw_ref, tb_ref = next(it), next(it)

        def np_roll(x, s):
            # np.roll semantics along the lane axis, hardware-convention agnostic.
            s = s % n_pix
            if s == 0:
                return x
            return pltpu.roll(x, shift=(s if roll_is_np else n_pix - s), axis=1)

        def shift9(x):
            """9 spatially shifted copies of x:(C,H*W) with 'reflect' boundaries.

            Tap order is (dy, dx) for dy in (-1,0,1) for dx in (-1,0,1), matching a
            3x3 weight laid out as (kh*3+kw, Cout, Cin).  Shifts are XLU lane rolls;
            boundary pixels are fixed with elementwise selects (reflect padding).
            """
            pix = jax.lax.broadcasted_iota(jnp.int32, x.shape, 1)
            if W & (W - 1) == 0:          # fast path: W power of two
                col = pix & (W - 1)
                row = pix >> int(math.log2(W))
            else:
                col = pix % W
                row = pix // W
            down = np_roll(x, n_pix - W)          # out[i] = x[i + W]  (row below)
            up = np_roll(x, W)                    # out[i] = x[i - W]  (row above)
            r_m1 = jnp.where(row == 0, down, up)          # dy = -1 (reflect top)
            r_p1 = jnp.where(row == H - 1, up, down)      # dy = +1 (reflect bottom)
            taps = []
            for r in (r_m1, x, r_p1):
                left = np_roll(r, n_pix - 1)      # out[i] = r[i + 1] (right neighbour)
                right = np_roll(r, 1)             # out[i] = r[i - 1] (left neighbour)
                s_m1 = jnp.where(col == 0, left, right)       # dx = -1 (reflect left)
                s_p1 = jnp.where(col == W - 1, right, left)   # dx = +1 (reflect right)
                taps.extend((s_m1, r, s_p1))
            return [a.astype(mxu_dtype) for a in taps]        # MXU operand dtype

        def conv3x3(segments, w_ref, b_ref):
            """Reflect-padded 3x3 conv over a (virtually) channel-concatenated input.

            segments: list of (taps, width).  Segment k uses w_ref[:, :, c0:c0+width];
            summing per-segment matmuls == conv over concat, with no concat in HBM.
            """
            acc = None
            c0 = 0
            for taps, width in segments:
                for k in range(9):
                    wk = w_ref[k, :, c0:c0 + width].astype(mxu_dtype)   # (Cout, width)
                    p = jnp.dot(wk, taps[k], preferred_element_type=f32)
                    acc = p if acc is None else acc + p
                c0 += width
            return acc + b_ref[...]                 # bias (Cout, 1) broadcasts on lanes

        def attention_block(segments, hw_ref, hb_ref, aw_ref, ab_ref, tlw_ref, tlb_ref):
            # conv_head
            t = conv3x3(segments, hw_ref, hb_ref)                        # (C, HW) f32
            C = t.shape[0]
            # AdaptiveAvgPool2d(1): per-channel spatial mean.
            g = jnp.sum(t, axis=1, keepdims=True) * (1.0 / n_pix)        # (C, 1)
            # attention_channel: 1x1 conv C -> 1 as a (1,C)@(C,HW) MXU matmul.
            c = jnp.dot(aw_ref[...].astype(mxu_dtype), t.astype(mxu_dtype),
                        preferred_element_type=f32) + ab_ref[...]        # (1, HW)
            # tail(cat([t, t*g, t*c])) = conv(t) + conv(t*g) + conv(t*c); all in VMEM.
            t_taps = shift9(t)
            tg_taps = shift9(t * g)
            tc_taps = shift9(t * c)
            y = conv3x3([(t_taps, C), (tg_taps, C), (tc_taps, C)], tlw_ref, tlb_ref)
            # fused LeakyReLU(0.1); blocks are built with res=False inside interActor.
            return jnp.where(y >= 0.0, y, lrelu_slope * y)

        t1 = t1_ref[0].astype(f32)                                       # (f1_dim, HW)
        t2 = t2_ref[0].astype(f32)                                       # (f2_dim, HW)
        t1_taps = shift9(t1)                       # reused by f1_head, f1_head_, skips
        t2_taps = shift9(t2)

        a = conv3x3([(t1_taps, c1)], f1w_ref, f1b_ref)                   # f1_head
        tex1 = conv3x3([(shift9(a), mid_half), (t1_taps, c1)],           # f1_head_ over
                       f1pw_ref, f1pb_ref)                               # cat([a, t1])
        f2h = conv3x3([(t2_taps, c2)], f2w_ref, f2b_ref)                 # f2_head

        # texture = cat([texture1, f2_head(t2)]) kept as separate segments (never
        # materialized); each block optionally appends the tensor1 skip segment.
        segments = [(shift9(tex1), mid_half), (shift9(f2h), mid_half)]
        for b in range(block_num):
            segs = segments + ([(t1_taps, c1)] if skip else [])
            y = attention_block(segs, *block_refs[b])
            segments = [(shift9(y), y.shape[0])]

        out = conv3x3(segments, tw_ref, tb_ref)                          # interActor.tail
        out_ref[...] = out[None].astype(out_ref.dtype)

    return kernel


# ----------------------------------------------------------------------------
# Wrapper: layout conversion + single pallas_call
# ----------------------------------------------------------------------------
def _w_taps(w_oihw):
    """(Cout, Cin, 3, 3) PyTorch OIHW -> (9, Cout, Cin), tap index = kh*3 + kw."""
    co, ci, kh, kw = w_oihw.shape
    return jnp.transpose(w_oihw, (2, 3, 0, 1)).reshape(kh * kw, co, ci)


def inter_actor_forward(tensor1, tensor2, params, *, skip=True,
                        mxu_dtype=jnp.bfloat16, roll_is_np=True, lrelu_slope=0.1):
    """Fused Pallas forward of interActor. tensor1/tensor2 are NCHW float32."""
    N, c1, H, W = tensor1.shape
    _, c2, _, _ = tensor2.shape
    n_pix = H * W
    mid_half = params["f1_head"]["w"].shape[0]
    out_ch = params["tail"]["w"].shape[0]
    block_num = len(params["blocks"])

    # NCHW -> (N, C, H*W): pure reshape, pixels land on the lane axis.
    args = [tensor1.reshape(N, c1, n_pix), tensor2.reshape(N, c2, n_pix)]
    in_specs = [pl.BlockSpec((1, c1, n_pix), lambda n: (n, 0, 0)),
                pl.BlockSpec((1, c2, n_pix), lambda n: (n, 0, 0))]

    def add_full(arr):
        args.append(arr)
        in_specs.append(pl.BlockSpec(arr.shape, lambda n, nd=arr.ndim: (0,) * nd))

    def add_conv(cp):
        add_full(_w_taps(cp["w"]))
        add_full(cp["b"].reshape(-1, 1))

    add_conv(params["f1_head"])
    add_conv(params["f1_head_"])
    add_conv(params["f2_head"])
    for bp in params["blocks"]:
        add_conv(bp["head"])
        add_full(bp["att"]["w"].reshape(1, -1))   # Conv2d(C,1,1) weight -> (1, C)
        add_full(bp["att"]["b"].reshape(1, 1))
        add_conv(bp["tail"])
    add_conv(params["tail"])

    kernel = _build_kernel(block_num=block_num, H=H, W=W, c1=c1, c2=c2,
                           mid_half=mid_half, skip=skip, mxu_dtype=mxu_dtype,
                           roll_is_np=roll_is_np, lrelu_slope=lrelu_slope)

    out = pl.pallas_call(
        kernel,
        out_shape=jax.ShapeDtypeStruct((N, out_ch, n_pix), jnp.float32),
        grid=(N,),
        in_specs=in_specs,
        out_specs=pl.BlockSpec((1, out_ch, n_pix), lambda n: (n, 0, 0)),
        compiler_params=pltpu.CompilerParams(dimension_semantics=("parallel",)),
    )(*args)
    return out.reshape(N, out_ch, H, W)


# ----------------------------------------------------------------------------
# Pure-JAX reference (mirrors the PyTorch module) and parameter init
# ----------------------------------------------------------------------------
def _conv_ref(x, w, b):
    xp = jnp.pad(x, ((0, 0), (0, 0), (1, 1), (1, 1)), mode="reflect")
    y = jax.lax.conv_general_dilated(
        xp, w, window_strides=(1, 1), padding="VALID",
        dimension_numbers=("NCHW", "OIHW", "NCHW"),
        precision=jax.lax.Precision.HIGHEST)
    return y + b[None, :, None, None]


def inter_actor_reference(tensor1, tensor2, params, skip=True, lrelu_slope=0.1):
    a = _conv_ref(tensor1, params["f1_head"]["w"], params["f1_head"]["b"])
    tex1 = _conv_ref(jnp.concatenate([a, tensor1], axis=1),
                     params["f1_head_"]["w"], params["f1_head_"]["b"])
    tex = jnp.concatenate(
        [tex1, _conv_ref(tensor2, params["f2_head"]["w"], params["f2_head"]["b"])], axis=1)
    for bp in params["blocks"]:
        if skip:
            tex = jnp.concatenate([tex, tensor1], axis=1)
        t = _conv_ref(tex, bp["head"]["w"], bp["head"]["b"])
        g = jnp.mean(t, axis=(2, 3), keepdims=True)
        c = jnp.sum(t * bp["att"]["w"].reshape(1, -1, 1, 1), axis=1, keepdims=True) \
            + bp["att"]["b"].reshape(1, 1, 1, 1)
        y = _conv_ref(jnp.concatenate([t, t * g, t * c], axis=1),
                      bp["tail"]["w"], bp["tail"]["b"])
        tex = jnp.where(y >= 0.0, y, lrelu_slope * y)
    return _conv_ref(tex, params["tail"]["w"], params["tail"]["b"])


def init_params(key, f1_dim, f2_dim, out_channels, mid_channels, block_num):
    def conv_p(k, cin, cout, ksize=3):
        kw, kb = jax.random.split(k)
        fan_in = cin * ksize * ksize
        w = jax.random.normal(kw, (cout, cin, ksize, ksize), jnp.float32) / math.sqrt(fan_in)
        b = 0.01 * jax.random.normal(kb, (cout,), jnp.float32)
        return {"w": w, "b": b}

    keys = jax.random.split(key, 4 + block_num)
    mid_half = mid_channels // 2
    params = {
        "f1_head": conv_p(keys[0], f1_dim, mid_half),
        "f1_head_": conv_p(keys[1], mid_half + f1_dim, mid_half),
        "f2_head": conv_p(keys[2], f2_dim, mid_half),
        "tail": conv_p(keys[3], mid_channels, out_channels),
        "blocks": [],
    }
    in_ch = mid_channels + f1_dim
    for i in range(block_num):
        bk = jax.random.split(keys[4 + i], 3)
        params["blocks"].append({
            "head": conv_p(bk[0], in_ch, in_ch),
            "att": conv_p(bk[1], in_ch, 1, ksize=1),
            "tail": conv_p(bk[2], in_ch * 3, mid_channels),
        })
    return params


# ----------------------------------------------------------------------------
if __name__ == "__main__":
    key = jax.random.PRNGKey(0)
    k1, k2, kp = jax.random.split(key, 3)

    # Small shapes matching the PyTorch spec: NCHW (2, 4, 16, 16).
    N, H, W = 2, 16, 16
    feature1_dim = feature2_dim = 4
    mid_channels, out_channels, block_num = 8, 4, 2

    tensor1 = jax.random.normal(k1, (N, feature1_dim, H, W), jnp.float32)
    tensor2 = jax.random.normal(k2, (N, feature2_dim, H, W), jnp.float32)
    params = init_params(kp, feature1_dim, feature2_dim, out_channels,
                         mid_channels, block_num)

    roll_is_np = _detect_roll_convention()

    fwd = jax.jit(functools.partial(inter_actor_forward, skip=True,
                                    mxu_dtype=jnp.bfloat16, roll_is_np=roll_is_np))
    out = jax.block_until_ready(fwd(tensor1, tensor2, params))

    assert out.shape == (N, out_channels, H, W), out.shape
    assert out.dtype == jnp.float32
    assert bool(jnp.all(jnp.isfinite(out)))

    # Numerical check against a pure-JAX reference (kernel uses bf16 MXU operands
    # with f32 accumulation -> loose tolerance).
    ref = inter_actor_reference(tensor1, tensor2, params, skip=True)
    err = float(jnp.max(jnp.abs(out - ref)))
    scale = max(1.0, float(jnp.max(jnp.abs(ref))))
    assert err <= 0.1 * scale, (err, scale)

    print("KERNEL_OK")
</pallas_src>

<mosaic_0001>
module attributes {stable_mosaic.version = 11 : i64} {
  func.func @probe(%arg0: memref<8x128xf32, #tpu.memory_space<vmem>>, %arg1: memref<8x128xf32, #tpu.memory_space<vmem>>) attributes {dimension_semantics = [], scalar_prefetch = 0 : i64, scratch_operands = 0 : i64, tpu.core_type = #tpu.core_type<tc>} {
    %c0 = arith.constant 0 : index
    %c0_0 = arith.constant 0 : index
    %0 = vector.load %arg0[%c0, %c0_0] : memref<8x128xf32, #tpu.memory_space<vmem>>, vector<8x128xf32>
    %c1_i32 = arith.constant 1 : i32
    %1 = tpu.dynamic_rotate %0 by %c1_i32 dim 1 : vector<8x128xf32>, i32 -> vector<8x128xf32>
    %c0_1 = arith.constant 0 : index
    %c0_2 = arith.constant 0 : index
    %2 = vector.load %arg1[%c0_1, %c0_2] : memref<8x128xf32, #tpu.memory_space<vmem>>, vector<8x128xf32>
    tpu.vector_store %arg1[%c0_1, %c0_2], %1 {strides = array<i32>} : memref<8x128xf32, #tpu.memory_space<vmem>>, vector<8x128xf32>,
    return
  }
}

</mosaic_0001>

<llo_original>
// kernel: tpu_custom_call.1
$region0: #{tpu_custom_call.1}
  #allocation0 [shape = 'u32[]', space=smem, size = 0x4, offset = 0x4, fixed_abs, tag = 'smem constant byte address 0x4 - core index']
  #allocation1 [shape = 'u32[72,128]{1,0:T(1,128)}', space=vmem, size = 0x9000, scoped, tag = 'internal scratch']
  %s0 = inlined_call_operand.hbm [shape: f32[8,128], index: 0, kind: input, shape index: {}]
  %s1 = inlined_call_operand.hbm [shape: f32[8,128], index: 1, kind: output, shape index: {}]
  %s2 = sld [smem:[#allocation0]]
  $region18: #{tpu_custom_call.1} parent=0
    _
  %s4 = ssub.s32 1, %s2
  %s5 = scalar_select 0, %s4, %s2
  $region1: #{tpu_custom_call.1} parent=0
    #allocation2 [shape = 'u8[4096]{0}', space=vmem, size = 0x1000, scoped, tag = 'input window, operand 0, single buffered']
    #allocation3 [shape = 's32[1]{0}', space=sflag, size = 0x4, scoped, tag = 'scoped memory for tpu_custom_call.1']
    #allocation4 [shape = 's32[1]{0}', space=sflag, size = 0x4, scoped, tag = 'scoped memory for tpu_custom_call.1']
    #allocation5 [shape = 'u8[4096]{0}', space=vmem, size = 0x1000, scoped, tag = 'output window, operand 0, single buffered']
    %6 = vsyncpa [#allocation3], 0
    %7 = vsyncpa [#allocation4], 0
    // Predicated region
    $region2: #{tpu_custom_call.1} parent=1 // pred_check
      _
    $region3: #{tpu_custom_call.1} parent=1 // pred_check_branch
      %9 = sbr.rel (0) target = $region5
    $region4: #{tpu_custom_call.1} parent=1 // pred_region
      %11 = vsyncadd [#allocation3], 0
      %s13 = sshll.u32 %s0, 4
      %s14 = int_to_ptr.hbm [resolvable:$true] %s13
      %s15 = sshll.u32 [#allocation2], 4
      %s16 = int_to_ptr.vmem [resolvable:$true] %s15
      %18 = dma.hbm_to_vmem [thread:$0]  %s14, 128, %s16, [#allocation3]
    $region5: #{tpu_custom_call.1} parent=1 // pred_fallthru
      _
    // Predicated region
    $region6: #{tpu_custom_call.1} parent=1 // pred_check
      _
    $region7: #{tpu_custom_call.1} parent=1 // pred_check_branch
      %20 = sbr.rel (0) target = $region9
    $region8: #{tpu_custom_call.1} parent=1 // pred_region
      %22 = dma.done [#allocation3], 128
    $region9: #{tpu_custom_call.1} parent=1 // pred_fallthru
      _
    %v23 = vld [vmem:[#allocation2] sm:$0xff]
    %24 = vrot.lane.b32.xlu0 %v23, 1
    %v25 = vpop.permute.xlu0 %24
    %26 = vst [vmem:[#allocation5] sm:$0xff] %v25
    // Predicated region
    $region10: #{tpu_custom_call.1} parent=1 // pred_check
      _
    $region11: #{tpu_custom_call.1} parent=1 // pred_check_branch
      %28 = sbr.rel (0) target = $region13
    $region12: #{tpu_custom_call.1} parent=1 // pred_region
      %30 = vsyncadd [#allocation4], 0
      %s32 = sshll.u32 [#allocation5], 4
      %s33 = int_to_ptr.vmem [resolvable:$true] %s32
      %s34 = sshll.u32 %s1, 4
      %s35 = int_to_ptr.hbm [resolvable:$true] %s34
      %37 = dma.vmem_to_hbm [thread:$0]  %s33, 128, %s35, [#allocation4]
    $region13: #{tpu_custom_call.1} parent=1 // pred_fallthru
      _
    // Predicated region
    $region14: #{tpu_custom_call.1} parent=1 // pred_check
      _
    $region15: #{tpu_custom_call.1} parent=1 // pred_check_branch
      %39 = sbr.rel (0) target = $region17
    $region16: #{tpu_custom_call.1} parent=1 // pred_region
      %41 = dma.done [#allocation4], 128
    $region17: #{tpu_custom_call.1} parent=1 // pred_fallthru
      _
    %42 = vsyncpa [#allocation3], 1
    %43 = vsyncpa [#allocation4], 1

</llo_original>
